<compile_context>
chip_gen: v7x
topology: tpu7x:2x2x1
jax: 0.10.0
libtpu: 0.0.40
codegen_flags: <defaults>
</compile_context>

<pallas_src>
import jax
import jax.numpy as jnp
from jax.experimental import pallas as pl
from jax.experimental.pallas import tpu as pltpu

LOG_SCALE_MAX = 2.0
LOG_SCALE_MIN = -10.0


def _vae_kernel(x_ref, we_ref, be_ref, wd_ref, bd_ref, eps_ref, enc_ref, xout_ref):
    # Cast streamed activations to the (possibly bf16) weight dtype for the MXU;
    # accumulate in f32, keep all elementwise math in f32.
    x = x_ref[...].astype(we_ref.dtype)

    # Fused encoder: enc = x @ W_enc + b_enc  -> [TB, 2H]  (one MXU dot, lane-dense)
    enc = jnp.dot(x, we_ref[...], preferred_element_type=jnp.float32) + be_ref[...]

    two_h = enc.shape[-1]
    h = two_h // 2

    # Clamp only the log_scale half via a lane mask (no concat / lane relayout),
    # then store the full [TB, 2H] block unmasked & lane-dense.
    col = jax.lax.broadcasted_iota(jnp.int32, enc.shape, 1)
    enc_out = jnp.where(col >= h, jnp.clip(enc, LOG_SCALE_MIN, LOG_SCALE_MAX), enc)
    enc_ref[...] = enc_out.astype(enc_ref.dtype)

    # Reparameterized sample: z = loc + exp(0.5 * log_scale) * eps
    loc = enc_out[:, :h]
    log_scale = enc_out[:, h:]
    scale = jnp.exp(0.5 * log_scale)
    z = loc + scale * eps_ref[...]

    # Decoder: x_ = sigmoid(z @ W_dec + b_dec)  -> [TB, D]
    logits = jnp.dot(z.astype(wd_ref.dtype), wd_ref[...],
                     preferred_element_type=jnp.float32) + bd_ref[...]
    xout_ref[...] = jax.nn.sigmoid(logits).astype(xout_ref.dtype)


def _pick_batch_tile(B, batch_tile):
    """Batch tile: big (fat DMAs), sublane-aligned, >=2 grid steps, prefer TB | B."""
    if B <= 16:
        # Tiny batches: split in two sublane-aligned halves when possible so the grid
        # has >= 2 steps (v7x megacore sharding + pipelining); else one full block.
        return 8 if B == 16 else B
    tb = min(batch_tile, (B + 1) // 2)        # at least 2 grid steps
    tb = max(8, (tb // 8) * 8)                # sublane-aligned
    # Prefer a tile that divides B (no masked partial last block), but do not
    # shrink the tile by more than 2x while searching.
    t = tb
    while t >= max(8, tb // 2):
        if B % t == 0:
            return t
        t -= 8
    return tb


def _vmem_limit_bytes():
    # Generation-aware scoped-VMEM limit: ~3/4 of physical, capped at 96 MiB.
    # Fallback assumes v7x's 64 MiB per-TC VMEM (safe everywhere).
    phys = 64 * 1024 * 1024
    try:
        phys = int(pltpu.get_tpu_info().vmem_capacity_bytes)
    except Exception:
        pass
    return min((phys * 3) // 4, 96 * 1024 * 1024)


def vae_forward(x, w_enc, b_enc, w_dec, b_dec, eps=None, *, deterministic=False,
                batch_tile=512, compute_dtype=jnp.float32):
    """Fused VAE forward.

    x:     [B, D]
    w_enc: [D, 2H]  b_enc: [1, 2H]   (nn.Linear(D, 2H) weight, transposed)
    w_dec: [H, D]   b_dec: [1, D]    (nn.Linear(H, D) weight, transposed)
    eps:   [B, H]   standard-normal noise (torch.randn_like equivalent)

    Returns (x_, loc, log_scale) with the same values as the PyTorch module.
    """
    B, D = x.shape
    two_h = w_enc.shape[1]
    H = two_h // 2

    if deterministic or eps is None:
        eps = jnp.zeros((B, H), jnp.float32)   # z_ = loc

    # MXU operand dtype (bf16 recommended on v6e/v7x); biases / accum / outputs stay f32.
    w_enc = w_enc.astype(compute_dtype)
    w_dec = w_dec.astype(compute_dtype)

    TB = _pick_batch_tile(B, batch_tile)
    grid = (pl.cdiv(B, TB),)

    tiled = lambda r, c: pl.BlockSpec((r, c), lambda i: (i, 0))      # batch-streamed
    resident = lambda r, c: pl.BlockSpec((r, c), lambda i: (0, 0))   # held in VMEM

    out_shapes = (
        jax.ShapeDtypeStruct((B, two_h), jnp.float32),  # enc = [loc | clamped log_scale]
        jax.ShapeDtypeStruct((B, D), jnp.float32),      # x_
    )

    enc, x_rec = pl.pallas_call(
        _vae_kernel,
        out_shape=out_shapes,
        grid=grid,
        in_specs=[
            tiled(TB, D),          # x
            resident(D, two_h),    # w_enc
            resident(1, two_h),    # b_enc
            resident(H, D),        # w_dec
            resident(1, D),        # b_dec
            tiled(TB, H),          # eps
        ],
        out_specs=[
            tiled(TB, two_h),      # enc (lane-dense 2H-wide block)
            tiled(TB, D),          # x_
        ],
        compiler_params=pltpu.CompilerParams(
            dimension_semantics=("parallel",),
            vmem_limit_bytes=_vmem_limit_bytes(),
        ),
    )(x, w_enc, b_enc, w_dec, b_dec, eps)

    # Cheap XLA slices outside the kernel (log_scale half is already clamped in-kernel).
    loc = enc[:, :H]
    log_scale = enc[:, H:]
    return x_rec, loc, log_scale


if __name__ == "__main__":
    key = jax.random.PRNGKey(0)
    B, D, H = 16, 32, 16  # batch, in_features, hid_features

    k_x, k_we, k_be, k_wd, k_bd, k_eps = jax.random.split(key, 6)

    x = jax.random.normal(k_x, (B, D), dtype=jnp.float32)
    # nn.Linear(D, 2H): weight [2H, D] stored transposed as [D, 2H].
    w_enc = 0.1 * jax.random.normal(k_we, (D, 2 * H), dtype=jnp.float32)
    b_enc = 0.1 * jax.random.normal(k_be, (1, 2 * H), dtype=jnp.float32)
    # nn.Linear(H, D): weight [D, H] stored transposed as [H, D].
    w_dec = 0.1 * jax.random.normal(k_wd, (H, D), dtype=jnp.float32)
    b_dec = 0.1 * jax.random.normal(k_bd, (1, D), dtype=jnp.float32)
    # Noise for the reparameterization trick (torch.randn_like equivalent).
    eps = jax.random.normal(k_eps, (B, H), dtype=jnp.float32)

    # Pure-JAX reference (matches the torch module's math).
    z_ref = x @ w_enc + b_enc
    loc_ref = z_ref[:, :H]
    logs_ref = jnp.clip(z_ref[:, H:], LOG_SCALE_MIN, LOG_SCALE_MAX)
    z_samp_ref = loc_ref + jnp.exp(0.5 * logs_ref) * eps
    x_ref = jax.nn.sigmoid(z_samp_ref @ w_dec + b_dec)

    # f32 MXU path: bit-tight check (grid has 2 steps at B=16, exercising the pipeline
    # and v7x megacore sharding).
    x_rec, loc, log_scale = vae_forward(x, w_enc, b_enc, w_dec, b_dec, eps)
    jax.block_until_ready((x_rec, loc, log_scale))
    assert x_rec.shape == (B, D) and loc.shape == (B, H) and log_scale.shape == (B, H)
    assert jnp.allclose(x_rec, x_ref, atol=1e-5)
    assert jnp.allclose(loc, loc_ref, atol=1e-5)
    assert jnp.allclose(log_scale, logs_ref, atol=1e-5)

    # bf16 MXU-operand path (native on v6e/v7x), f32 accumulation: relaxed tolerance.
    x_rec_bf, loc_bf, logs_bf = vae_forward(
        x, w_enc, b_enc, w_dec, b_dec, eps, compute_dtype=jnp.bfloat16)
    jax.block_until_ready((x_rec_bf, loc_bf, logs_bf))
    assert jnp.allclose(x_rec_bf, x_ref, atol=3e-2)
    assert jnp.allclose(loc_bf, loc_ref, atol=3e-2)
    assert jnp.allclose(logs_bf, logs_ref, atol=3e-2)

    # Deterministic mode (z_ = loc), as in the torch module's deterministic=True.
    x_det, loc_det, logs_det = vae_forward(
        x, w_enc, b_enc, w_dec, b_dec, deterministic=True)
    jax.block_until_ready(x_det)
    x_det_ref = jax.nn.sigmoid(loc_ref @ w_dec + b_dec)
    assert jnp.allclose(x_det, x_det_ref, atol=1e-5)

    print("KERNEL_OK")
</pallas_src>

<mosaic_0001>
module attributes {stable_mosaic.version = 11 : i64} {
  func.func @_vae_kernel(%arg0: i32, %arg1: memref<8x32xf32, #tpu.memory_space<vmem>>, %arg2: memref<32x32xf32, #tpu.memory_space<vmem>>, %arg3: memref<1x32xf32, #tpu.memory_space<vmem>>, %arg4: memref<16x32xf32, #tpu.memory_space<vmem>>, %arg5: memref<1x32xf32, #tpu.memory_space<vmem>>, %arg6: memref<8x16xf32, #tpu.memory_space<vmem>>, %arg7: memref<8x32xf32, #tpu.memory_space<vmem>>, %arg8: memref<8x32xf32, #tpu.memory_space<vmem>>) attributes {dimension_semantics = [#tpu.dimension_semantics<parallel>], iteration_bounds = array<i64: 2>, scalar_prefetch = 0 : i64, scratch_operands = 0 : i64, tpu.core_type = #tpu.core_type<tc>, window_params = [{transform_indices = @transform_0, window_bounds = array<i64: 8, 32>}, {pipeline_mode = #tpu.pipeline_mode<synchronous>, transform_indices = @transform_1, window_bounds = array<i64: 32, 32>}, {pipeline_mode = #tpu.pipeline_mode<synchronous>, transform_indices = @transform_2, window_bounds = array<i64: 1, 32>}, {pipeline_mode = #tpu.pipeline_mode<synchronous>, transform_indices = @transform_3, window_bounds = array<i64: 16, 32>}, {pipeline_mode = #tpu.pipeline_mode<synchronous>, transform_indices = @transform_4, window_bounds = array<i64: 1, 32>}, {transform_indices = @transform_5, window_bounds = array<i64: 8, 16>}, {transform_indices = @transform_6, window_bounds = array<i64: 8, 32>}, {transform_indices = @transform_7, window_bounds = array<i64: 8, 32>}]} {
    %c0 = arith.constant 0 : index
    %c0_0 = arith.constant 0 : index
    %0 = vector.load %arg1[%c0, %c0_0] : memref<8x32xf32, #tpu.memory_space<vmem>>, vector<8x32xf32>
    %c0_1 = arith.constant 0 : index
    %c0_2 = arith.constant 0 : index
    %1 = vector.load %arg2[%c0_1, %c0_2] : memref<32x32xf32, #tpu.memory_space<vmem>>, vector<32x32xf32>
    %cst = arith.constant dense<0.000000e+00> : vector<8x32xf32>
    %2 = tpu.matmul %0, %1, %cst {dimension_numbers = #tpu.dot_dimension_numbers<[1], [0], [0], [1], [0, 0, 1, 1], [], []>} : vector<8x32xf32>, vector<32x32xf32>, vector<8x32xf32> -> vector<8x32xf32>
    %c0_3 = arith.constant 0 : index
    %c0_4 = arith.constant 0 : index
    %3 = vector.load %arg3[%c0_3, %c0_4] : memref<1x32xf32, #tpu.memory_space<vmem>>, vector<1x32xf32>
    %4 = vector.broadcast %3 : vector<1x32xf32> to vector<8x32xf32>
    %5 = arith.addf %2, %4 : vector<8x32xf32>
    %6 = tpu.iota {dimensions = array<i32: 1>} : vector<8x32xi32>
    %c16_i32 = arith.constant 16 : i32
    %7 = vector.broadcast %c16_i32 : i32 to vector<8x32xi32>
    %8 = arith.cmpi sge, %6, %7 : vector<8x32xi32>
    %cst_5 = arith.constant -1.000000e+01 : f32
    %cst_6 = arith.constant 2.000000e+00 : f32
    %9 = vector.broadcast %cst_5 : f32 to vector<8x32xf32>
    %10 = arith.maximumf %9, %5 : vector<8x32xf32>
    %11 = vector.broadcast %cst_6 : f32 to vector<8x32xf32>
    %12 = arith.minimumf %11, %10 : vector<8x32xf32>
    %13 = arith.select %8, %12, %5 : vector<8x32xi1>, vector<8x32xf32>
    %c0_7 = arith.constant 0 : index
    %c0_8 = arith.constant 0 : index
    %14 = vector.load %arg7[%c0_7, %c0_8] : memref<8x32xf32, #tpu.memory_space<vmem>>, vector<8x32xf32>
    tpu.vector_store %arg7[%c0_7, %c0_8], %13 {strides = array<i32>} : memref<8x32xf32, #tpu.memory_space<vmem>>, vector<8x32xf32>,
    %15 = vector.extract_strided_slice %13 {offsets = [0, 0], sizes = [8, 16], strides = [1, 1]} : vector<8x32xf32> to vector<8x16xf32>
    %16 = vector.extract_strided_slice %13 {offsets = [0, 16], sizes = [8, 16], strides = [1, 1]} : vector<8x32xf32> to vector<8x16xf32>
    %cst_9 = arith.constant 5.000000e-01 : f32
    %17 = vector.broadcast %cst_9 : f32 to vector<8x16xf32>
    %18 = arith.mulf %17, %16 : vector<8x16xf32>
    %19 = math.exp %18 : vector<8x16xf32>
    %c0_10 = arith.constant 0 : index
    %c0_11 = arith.constant 0 : index
    %20 = vector.load %arg6[%c0_10, %c0_11] : memref<8x16xf32, #tpu.memory_space<vmem>>, vector<8x16xf32>
    %21 = arith.mulf %19, %20 : vector<8x16xf32>
    %22 = arith.addf %15, %21 : vector<8x16xf32>
    %c0_12 = arith.constant 0 : index
    %c0_13 = arith.constant 0 : index
    %23 = vector.load %arg4[%c0_12, %c0_13] : memref<16x32xf32, #tpu.memory_space<vmem>>, vector<16x32xf32>
    %cst_14 = arith.constant dense<0.000000e+00> : vector<8x32xf32>
    %24 = tpu.matmul %22, %23, %cst_14 {dimension_numbers = #tpu.dot_dimension_numbers<[1], [0], [0], [1], [0, 0, 1, 1], [], []>} : vector<8x16xf32>, vector<16x32xf32>, vector<8x32xf32> -> vector<8x32xf32>
    %c0_15 = arith.constant 0 : index
    %c0_16 = arith.constant 0 : index
    %25 = vector.load %arg5[%c0_15, %c0_16] : memref<1x32xf32, #tpu.memory_space<vmem>>, vector<1x32xf32>
    %26 = vector.broadcast %25 : vector<1x32xf32> to vector<8x32xf32>
    %27 = arith.addf %24, %26 : vector<8x32xf32>
    %28 = arith.negf %27 : vector<8x32xf32>
    %29 = math.exp %28 : vector<8x32xf32>
    %cst_17 = arith.constant 1.000000e+00 : f32
    %30 = vector.broadcast %cst_17 : f32 to vector<8x32xf32>
    %31 = arith.addf %30, %29 : vector<8x32xf32>
    %32 = arith.divf %30, %31 : vector<8x32xf32>
    %c0_18 = arith.constant 0 : index
    %c0_19 = arith.constant 0 : index
    %33 = vector.load %arg8[%c0_18, %c0_19] : memref<8x32xf32, #tpu.memory_space<vmem>>, vector<8x32xf32>
    tpu.vector_store %arg8[%c0_18, %c0_19], %32 {strides = array<i32>} : memref<8x32xf32, #tpu.memory_space<vmem>>, vector<8x32xf32>,
    return
  }
  func.func @transform_0(%arg0: i32) -> (i32, i32) {
    %c0_i32 = arith.constant 0 : i32
    %c0_i32_0 = arith.constant 0 : i32
    return %arg0, %c0_i32 : i32, i32
  }
  func.func @transform_1(%arg0: i32) -> (i32, i32) {
    %c0_i32 = arith.constant 0 : i32
    %c0_i32_0 = arith.constant 0 : i32
    %c0_i32_1 = arith.constant 0 : i32
    return %c0_i32, %c0_i32_0 : i32, i32
  }
  func.func @transform_2(%arg0: i32) -> (i32, i32) {
    %c0_i32 = arith.constant 0 : i32
    %c0_i32_0 = arith.constant 0 : i32
    %c0_i32_1 = arith.constant 0 : i32
    return %c0_i32, %c0_i32_0 : i32, i32
  }
  func.func @transform_3(%arg0: i32) -> (i32, i32) {
    %c0_i32 = arith.constant 0 : i32
    %c0_i32_0 = arith.constant 0 : i32
    %c0_i32_1 = arith.constant 0 : i32
    return %c0_i32, %c0_i32_0 : i32, i32
  }
  func.func @transform_4(%arg0: i32) -> (i32, i32) {
    %c0_i32 = arith.constant 0 : i32
    %c0_i32_0 = arith.constant 0 : i32
    %c0_i32_1 = arith.constant 0 : i32
    return %c0_i32, %c0_i32_0 : i32, i32
  }
  func.func @transform_5(%arg0: i32) -> (i32, i32) {
    %c0_i32 = arith.constant 0 : i32
    %c0_i32_0 = arith.constant 0 : i32
    return %arg0, %c0_i32 : i32, i32
  }
  func.func @transform_6(%arg0: i32) -> (i32, i32) {
    %c0_i32 = arith.constant 0 : i32
    %c0_i32_0 = arith.constant 0 : i32
    return %arg0, %c0_i32 : i32, i32
  }
  func.func @transform_7(%arg0: i32) -> (i32, i32) {
    %c0_i32 = arith.constant 0 : i32
    %c0_i32_0 = arith.constant 0 : i32
    return %arg0, %c0_i32 : i32, i32
  }
}

</mosaic_0001>

<llo_original>
// kernel: tpu_custom_call.1
$region0: #{tpu_custom_call.1}
  #allocation0 [shape = 'u32[]', space=smem, size = 0x4, offset = 0x4, fixed_abs, tag = 'smem constant byte address 0x4 - core index']
  #allocation1 [shape = 'u32[144,128]{1,0:T(1,128)}', space=vmem, size = 0x12000, scoped, tag = 'internal scratch']
  %s0 = inlined_call_operand.hbm [shape: f32[16,32], index: 0, kind: input, shape index: {}]
  %s1 = inlined_call_operand.hbm [shape: f32[32,32], index: 1, kind: input, shape index: {}]
  %s2 = inlined_call_operand.vmem [shape: f32[1,32], index: 2, kind: input, shape index: {}]
  %s3 = inlined_call_operand.hbm [shape: f32[16,32], index: 3, kind: input, shape index: {}]
  %s4 = inlined_call_operand.vmem [shape: f32[1,32], index: 4, kind: input, shape index: {}]
  %s5 = inlined_call_operand.vmem [shape: f32[16,16], index: 5, kind: input, shape index: {}]
  %s6 = inlined_call_operand.hbm [shape: f32[16,32], index: 6, kind: output, shape index: {0}]
  %s7 = inlined_call_operand.hbm [shape: f32[16,32], index: 7, kind: output, shape index: {1}]
  %8 = xla_tuple %s6, %s7
  %s9 = sld [smem:[#allocation0]]
  $region77: #{tpu_custom_call.1} parent=0
    _
  %s11 = ssub.s32 1, %s9
  %s12 = scalar_select 0, %s11, %s9
  $region1: #{tpu_custom_call.1} parent=0
    #allocation2 [shape = 'u8[8192]{0}', space=vmem, size = 0x2000, scoped, tag = 'input window, operand 0']
    #allocation3 [shape = 's32[2]{0}', space=sflag, size = 0x8, scoped, tag = 'scoped memory for tpu_custom_call.1']
    #allocation4 [shape = 's32[2]{0}', space=sflag, size = 0x8, scoped, tag = 'scoped memory for tpu_custom_call.1']
    #allocation5 [shape = 'u8[16384]{0}', space=vmem, size = 0x4000, scoped, tag = 'input window, operand 1, single buffered']
    #allocation6 [shape = 's32[1]{0}', space=sflag, size = 0x4, scoped, tag = 'scoped memory for tpu_custom_call.1']
    #allocation7 [shape = 'u8[8192]{0}', space=vmem, size = 0x2000, scoped, tag = 'input window, operand 3, single buffered']
    #allocation8 [shape = 'u8[8192]{0}', space=vmem, size = 0x2000, scoped, tag = 'output window, operand 0']
    #allocation9 [shape = 'u8[8192]{0}', space=vmem, size = 0x2000, scoped, tag = 'output window, operand 1']
    #allocation10 [shape = 's32[2]{0}', space=sflag, size = 0x8, scoped, tag = 'scoped memory for tpu_custom_call.1']
    %13 = vsyncpa [#allocation3], 0
    %s14 = scalar_lea.sflag [#allocation3], 1
    %15 = vsyncpa %s14, 0
    %16 = vsyncpa [#allocation6], 0
    %17 = vsyncpa [#allocation4], 0
    %s18 = scalar_lea.sflag [#allocation4], 1
    %19 = vsyncpa %s18, 0
    %20 = vsyncpa [#allocation10], 0
    %s21 = scalar_lea.sflag [#allocation10], 1
    %22 = vsyncpa %s21, 0
    loop: start=0, step=1, limit=4
    $region2: #{tpu_custom_call.1} parent=1 // loop_pre_header
      _
    $region3: #{tpu_custom_call.1} parent=1 // loop_header
      %s24 = sphi 0, %s28
      %p25 = scmp.ge.s32.totalorder %s24, 4
      %s34 = sphi 0, %s36
      %s37 = sphi 0, %s34
      %s38 = sphi 0, %s37
      %s54 = sphi 0, %s38
      %s58 = sphi 0, %s58
      %s60 = sphi 0, %s58
      %s61 = sphi 0, %s60
      %s75 = sphi 0, %s61
      %s79 = sphi 0, %s79
      %s81 = sphi 0, %s79
      %s82 = sphi 0, %s81
      %s96 = sphi 0, %s82
      %s100 = sphi 0, %s100
      %s102 = sphi 0, %s100
      %s103 = sphi 0, %s102
      %s117 = sphi 0, %s103
      %s121 = sphi 0, %s121
      %s123 = sphi 0, %s121
      %s124 = sphi 0, %s123
      %s138 = sphi 0, %s124
      %s144 = sphi 0, %s146
      %s147 = sphi 0, %s144
      %s148 = sphi 0, %s147
      %s164 = sphi 0, %s148
      %s170 = sphi 0, %s172
      %s173 = sphi 0, %s170
      %s174 = sphi 0, %s173
      %s190 = sphi 0, %s174
      %s196 = sphi 0, %s198
      %s199 = sphi 0, %s196
      %s200 = sphi 0, %s199
      %s216 = sphi 0, %s200
    $region4: #{tpu_custom_call.1} parent=1 // loop_header_branch
      %27 = sbr.rel (%p25) target = $region8
    $region5: #{tpu_custom_call.1} parent=1 // loop_body
      %s29 = ssub.s32 %s24, 1
      %s30 = ssub.s32 %s24, 2
      %s31 = sadd.s32 %s24, 1
      %s32 = ssub.s32 %s24, %s31
      %p33 = scmp.eq.s32.totalorder %s32, 0
      %s35 = sadd.s32 %s34, 1
      %s36 = scalar_select %p33, %s34, %s35
      %p39 = pneg %p33
      %p40 = scmp.eq.s32.totalorder %s24, 1
      %p41 = por %p39, %p40
      %p42 = scmp.ne.s32.totalorder %s34, %s37
      %p43 = scmp.eq.s32.totalorder %s24, 0
      %p44 = por %p42, %p43
      %p45 = scmp.ne.s32.totalorder %s34, %s37
      %p46 = scmp.eq.s32.totalorder %s29, 1
      %p47 = por %p45, %p46
      %p48 = scmp.ne.s32.totalorder %s37, %s38
      %p49 = scmp.eq.s32.totalorder %s29, 0
      %p50 = por %p48, %p49
      %p51 = scmp.ne.s32.totalorder %s37, %s38
      %p52 = scmp.eq.s32.totalorder %s30, 1
      %p53 = por %p51, %p52
      %p55 = scmp.ne.s32.totalorder %s38, %s54
      %p56 = scmp.eq.s32.totalorder %s30, 0
      %p57 = por %p55, %p56
      %s59 = sadd.s32 %s58, 1
      %p62 = scmp.eq.s32.totalorder %s24, 1
      %p63 = scmp.ne.s32.totalorder %s58, %s60
      %p64 = scmp.eq.s32.totalorder %s24, 0
      %p65 = por %p63, %p64
      %p66 = scmp.ne.s32.totalorder %s58, %s60
      %p67 = scmp.eq.s32.totalorder %s29, 1
      %p68 = por %p66, %p67
      %p69 = scmp.ne.s32.totalorder %s60, %s61
      %p70 = scmp.eq.s32.totalorder %s29, 0
      %p71 = por %p69, %p70
      %p72 = scmp.ne.s32.totalorder %s60, %s61
      %p73 = scmp.eq.s32.totalorder %s30, 1
      %p74 = por %p72, %p73
      %p76 = scmp.ne.s32.totalorder %s61, %s75
      %p77 = scmp.eq.s32.totalorder %s30, 0
      %p78 = por %p76, %p77
      %s80 = sadd.s32 %s79, 1
      %p83 = scmp.eq.s32.totalorder %s24, 1
      %p84 = scmp.ne.s32.totalorder %s79, %s81
      %p85 = scmp.eq.s32.totalorder %s24, 0
      %p86 = por %p84, %p85
      %p87 = scmp.ne.s32.totalorder %s79, %s81
      %p88 = scmp.eq.s32.totalorder %s29, 1
      %p89 = por %p87, %p88
      %p90 = scmp.ne.s32.totalorder %s81, %s82
      %p91 = scmp.eq.s32.totalorder %s29, 0
      %p92 = por %p90, %p91
      %p93 = scmp.ne.s32.totalorder %s81, %s82
      %p94 = scmp.eq.s32.totalorder %s30, 1
      %p95 = por %p93, %p94
      %p97 = scmp.ne.s32.totalorder %s82, %s96
      %p98 = scmp.eq.s32.totalorder %s30, 0
      %p99 = por %p97, %p98
      %s101 = sadd.s32 %s100, 1
      %p104 = scmp.eq.s32.totalorder %s24, 1
      %p105 = scmp.ne.s32.totalorder %s100, %s102
      %p106 = scmp.eq.s32.totalorder %s24, 0
      %p107 = por %p105, %p106
      %p108 = scmp.ne.s32.totalorder %s100, %s102
      %p109 = scmp.eq.s32.totalorder %s29, 1
      %p110 = por %p108, %p109
      %p111 = scmp.ne.s32.totalorder %s102, %s103
      %p112 = scmp.eq.s32.totalorder %s29, 0
      %p113 = por %p111, %p112
      %p114 = scmp.ne.s32.totalorder %s102, %s103
      %p115 = scmp.eq.s32.totalorder %s30, 1
      %p116 = por %p114, %p115
      %p118 = scmp.ne.s32.totalorder %s103, %s117
      %p119 = scmp.eq.s32.totalorder %s30, 0
      %p120 = por %p118, %p119
      %s122 = sadd.s32 %s121, 1
      %p125 = scmp.eq.s32.totalorder %s24, 1
      %p126 = scmp.ne.s32.totalorder %s121, %s123
      %p127 = scmp.eq.s32.totalorder %s24, 0
      %p128 = por %p126, %p127
      %p129 = scmp.ne.s32.totalorder %s121, %s123
      %p130 = scmp.eq.s32.totalorder %s29, 1
      %p131 = por %p129, %p130
      %p132 = scmp.ne.s32.totalorder %s123, %s124
      %p133 = scmp.eq.s32.totalorder %s29, 0
      %p134 = por %p132, %p133
      %p135 = scmp.ne.s32.totalorder %s123, %s124
      %p136 = scmp.eq.s32.totalorder %s30, 1
      %p137 = por %p135, %p136
      %p139 = scmp.ne.s32.totalorder %s124, %s138
      %p140 = scmp.eq.s32.totalorder %s30, 0
      %p141 = por %p139, %p140
      %s142 = ssub.s32 %s24, %s31
      %p143 = scmp.eq.s32.totalorder %s142, 0
      %s145 = sadd.s32 %s144, 1
      %s146 = scalar_select %p143, %s144, %s145
      %p149 = pneg %p143
      %p150 = scmp.eq.s32.totalorder %s24, 1
      %p151 = por %p149, %p150
      %p152 = scmp.ne.s32.totalorder %s144, %s147
      %p153 = scmp.eq.s32.totalorder %s24, 0
      %p154 = por %p152, %p153
      %p155 = scmp.ne.s32.totalorder %s144, %s147
      %p156 = scmp.eq.s32.totalorder %s29, 1
      %p157 = por %p155, %p156
      %p158 = scmp.ne.s32.totalorder %s147, %s148
      %p159 = scmp.eq.s32.totalorder %s29, 0
      %p160 = por %p158, %p159
      %p161 = scmp.ne.s32.totalorder %s147, %s148
      %p162 = scmp.eq.s32.totalorder %s30, 1
      %p163 = por %p161, %p162
      %p165 = scmp.ne.s32.totalorder %s148, %s164
      %p166 = scmp.eq.s32.totalorder %s30, 0
      %p167 = por %p165, %p166
      %s168 = ssub.s32 %s24, %s31
      %p169 = scmp.eq.s32.totalorder %s168, 0
      %s171 = sadd.s32 %s170, 1
      %s172 = scalar_select %p169, %s170, %s171
      %p175 = pneg %p169
      %p176 = scmp.eq.s32.totalorder %s24, 1
      %p177 = por %p175, %p176
      %p178 = scmp.ne.s32.totalorder %s170, %s173
      %p179 = scmp.eq.s32.totalorder %s24, 0
      %p180 = por %p178, %p179
      %p181 = scmp.ne.s32.totalorder %s170, %s173
      %p182 = scmp.eq.s32.totalorder %s29, 1
      %p183 = por %p181, %p182
      %p184 = scmp.ne.s32.totalorder %s173, %s174
      %p185 = scmp.eq.s32.totalorder %s29, 0
      %p186 = por %p184, %p185
      %p187 = scmp.ne.s32.totalorder %s173, %s174
      %p188 = scmp.eq.s32.totalorder %s30, 1
      %p189 = por %p187, %p188
      %p191 = scmp.ne.s32.totalorder %s174, %s190
      %p192 = scmp.eq.s32.totalorder %s30, 0
      %p193 = por %p191, %p192
      %s194 = ssub.s32 %s24, %s31
      %p195 = scmp.eq.s32.totalorder %s194, 0
      %s197 = sadd.s32 %s196, 1
      %s198 = scalar_select %p195, %s196, %s197
      %p201 = pneg %p195
      %p202 = scmp.eq.s32.totalorder %s24, 1
      %p203 = por %p201, %p202
      %p204 = scmp.ne.s32.totalorder %s196, %s199
      %p205 = scmp.eq.s32.totalorder %s24, 0
      %p206 = por %p204, %p205
      %p207 = scmp.ne.s32.totalorder %s196, %s199
      %p208 = scmp.eq.s32.totalorder %s29, 1
      %p209 = por %p207, %p208
      %p210 = scmp.ne.s32.totalorder %s199, %s200
      %p211 = scmp.eq.s32.totalorder %s29, 0
      %p212 = por %p210, %p211
      %p213 = scmp.ne.s32.totalorder %s199, %s200
      %p214 = scmp.eq.s32.totalorder %s30, 1
      %p215 = por %p213, %p214
      %p217 = scmp.ne.s32.totalorder %s200, %s216
      %p218 = scmp.eq.s32.totalorder %s30, 0
      %p219 = por %p217, %p218
      %p220 = scmp.le.s32.totalorder 1, %s24
      %p221 = scmp.lt.s32.totalorder %s24, 3
      %p222 = pnand %p220, %p221
      %p223 = pneg %p222
      // Predicated region
      $region9: #{tpu_custom_call.1} parent=5 // pred_check
        _
      $region10: #{tpu_custom_call.1} parent=5 // pred_check_branch
        %225 = sbr.rel (%p222) target = $region12
      $region11: #{tpu_custom_call.1} parent=5 // pred_region
        %s226 = ssub.s32 %s24, 1
        // Predicated region
        $region13: #{tpu_custom_call.1} parent=11 // pred_check
          %p227 = pneg %p71
        $region14: #{tpu_custom_call.1} parent=11 // pred_check_branch
          %229 = sbr.rel (%p227) target = $region16
        $region15: #{tpu_custom_call.1} parent=11 // pred_region
          %s231 = ssub.s32 512, 512
          %232 = vsyncadd [#allocation6], %s231
          %s233 = sshll.u32 [#allocation5], 4
          %s234 = int_to_ptr.vmem [resolvable:$true] %s233
          %239 = dma.hbm_to_vmem [thread:$0]  %s1, 512, %s234, [#allocation6], 128, 128, 8
        $region16: #{tpu_custom_call.1} parent=11 // pred_fallthru
          _
        // Predicated region
        $region17: #{tpu_custom_call.1} parent=11 // pred_check
          %p240 = pneg %p92
        $region18: #{tpu_custom_call.1} parent=11 // pred_check_branch
          %242 = sbr.rel (%p240) target = $region20
        $region19: #{tpu_custom_call.1} parent=11 // pred_region
          _
        $region20: #{tpu_custom_call.1} parent=11 // pred_fallthru
          _
        // Predicated region
        $region21: #{tpu_custom_call.1} parent=11 // pred_check
          %p243 = pneg %p113
        $region22: #{tpu_custom_call.1} parent=11 // pred_check_branch
          %245 = sbr.rel (%p243) target = $region24
        $region23: #{tpu_custom_call.1} parent=11 // pred_region
          %s247 = ssub.s32 256, 256
          %248 = vsyncadd [#allocation6], %s247
          %s249 = sshll.u32 [#allocation7], 4
          %s250 = int_to_ptr.vmem [resolvable:$true] %s249
          %255 = dma.hbm_to_vmem [thread:$0]  %s3, 256, %s250, [#allocation6], 128, 128, 8
        $region24: #{tpu_custom_call.1} parent=11 // pred_fallthru
          _
        // Predicated region
        $region25: #{tpu_custom_call.1} parent=11 // pred_check
          %p256 = pneg %p134
        $region26: #{tpu_custom_call.1} parent=11 // pred_check_branch
          %258 = sbr.rel (%p256) target = $region28
        $region27: #{tpu_custom_call.1} parent=11 // pred_region
          _
        $region28: #{tpu_custom_call.1} parent=11 // pred_fallthru
          _
      $region12: #{tpu_custom_call.1} parent=5 // pred_fallthru
        _
      %p259 = scmp.lt.s32.totalorder %s24, 2
      // Predicated region
      $region29: #{tpu_custom_call.1} parent=5 // pred_check
        %p260 = pneg %p259
      $region30: #{tpu_custom_call.1} parent=5 // pred_check_branch
        %262 = sbr.rel (%p260) target = $region32
      $region31: #{tpu_custom_call.1} parent=5 // pred_region
        // Predicated region
        $region33: #{tpu_custom_call.1} parent=31 // pred_check
          %p263 = pneg %p44
        $region34: #{tpu_custom_call.1} parent=31 // pred_check_branch
          %265 = sbr.rel (%p263) target = $region36
        $region35: #{tpu_custom_call.1} parent=31 // pred_region
          %s266 = sand.u32 %s34, 1
          %s267 = scalar_lea.sflag [#allocation3], %s266
          %s268 = sand.u32 %s34, 1
          %s269 = smul.addr %s268, 8
          %s270 = scalar_lea.vmem [#allocation2], %s269
          %s272 = ssub.s32 128, 128
          %273 = vsyncadd %s267, %s272
          %s274 = smul.addr %s24, 128
          %s275 = scalar_lea.hbm %s0, %s274
          %s277 = sshll.u32 %s270, 4
          %s278 = int_to_ptr.vmem [resolvable:$true] %s277
          %280 = dma.hbm_to_vmem [thread:$0]  %s275, 128, %s278, %s267
        $region36: #{tpu_custom_call.1} parent=31 // pred_fallthru
          _
        // Predicated region
        $region37: #{tpu_custom_call.1} parent=31 // pred_check
          %p281 = pneg %p154
        $region38: #{tpu_custom_call.1} parent=31 // pred_check_branch
          %283 = sbr.rel (%p281) target = $region40
        $region39: #{tpu_custom_call.1} parent=31 // pred_region
          %p284 = scmp.lt.s32.totalorder %s24, 1
          %s285 = scalar_select %p284, %s24, 1
          %s286 = smul.addr %s285, 8
          %s287 = scalar_lea.vmem %s5, %s286
        $region40: #{tpu_custom_call.1} parent=31 // pred_fallthru
          _
      $region32: #{tpu_custom_call.1} parent=5 // pred_fallthru
        _
      %p288 = scmp.le.s32.totalorder 1, %s24
      %p289 = scmp.lt.s32.totalorder %s24, 3
      %p290 = pnand %p288, %p289
      %p291 = pneg %p290
      // Predicated region
      $region41: #{tpu_custom_call.1} parent=5 // pred_check
        _
      $region42: #{tpu_custom_call.1} parent=5 // pred_check_branch
        %293 = sbr.rel (%p290) target = $region44
      $region43: #{tpu_custom_call.1} parent=5 // pred_region
        %s294 = ssub.s32 %s24, 1
        %s295 = sand.u32 %s37, 1
        %s296 = scalar_lea.sflag [#allocation3], %s295
        %s297 = sand.u32 %s37, 1
        %s298 = smul.addr %s297, 8
        %s299 = scalar_lea.vmem [#allocation2], %s298
        // Predicated region
        $region45: #{tpu_custom_call.1} parent=43 // pred_check
          %p300 = pneg %p50
        $region46: #{tpu_custom_call.1} parent=43 // pred_check_branch
          %302 = sbr.rel (%p300) target = $region48
        $region47: #{tpu_custom_call.1} parent=43 // pred_region
          %303 = dma.done %s296, 128
        $region48: #{tpu_custom_call.1} parent=43 // pred_fallthru
          _
        // Predicated region
        $region49: #{tpu_custom_call.1} parent=43 // pred_check
          %p304 = pneg %p71
        $region50: #{tpu_custom_call.1} parent=43 // pred_check_branch
          %306 = sbr.rel (%p304) target = $region52
        $region51: #{tpu_custom_call.1} parent=43 // pred_region
          %307 = dma.done [#allocation6], 512
        $region52: #{tpu_custom_call.1} parent=43 // pred_fallthru
          _
        // Predicated region
        $region53: #{tpu_custom_call.1} parent=43 // pred_check
          %p308 = pneg %p113
        $region54: #{tpu_custom_call.1} parent=43 // pred_check_branch
          %310 = sbr.rel (%p308) target = $region56
        $region55: #{tpu_custom_call.1} parent=43 // pred_region
          %311 = dma.done [#allocation6], 256
        $region56: #{tpu_custom_call.1} parent=43 // pred_fallthru
          _
        %s312 = sand.u32 %s37, 1
        %s313 = scalar_lea.sflag [#allocation3], %s312
        %s314 = sand.u32 %s37, 1
        %s315 = smul.addr %s314, 8
        %s316 = scalar_lea.vmem [#allocation2], %s315
        %p317 = pneg %p50
        %p318 = pneg %p47
        %p319 = pneg %p71
        %p320 = pneg %p68
        %p321 = pneg %p92
        %p322 = pneg %p89
        %p323 = pneg %p113
        %p324 = pneg %p110
        %p325 = pneg %p134
        %p326 = pneg %p131
        %p327 = scmp.lt.s32.totalorder %s29, 1
        %s328 = scalar_select %p327, %s29, 1
        %s329 = smul.addr %s328, 8
        %s330 = scalar_lea.vmem %s5, %s329
        %p331 = pneg %p160
        %p332 = pneg %p157
        %p333 = pneg %p186
        %p334 = pneg %p183
        %s335 = sand.u32 %s173, 1
        %s336 = scalar_lea.sflag [#allocation4], %s335
        %s337 = sand.u32 %s173, 1
        %s338 = smul.addr %s337, 8
        %s339 = scalar_lea.vmem [#allocation8], %s338
        %p340 = pneg %p212
        %p341 = pneg %p209
        %s342 = sand.u32 %s199, 1
        %s343 = scalar_lea.sflag [#allocation10], %s342
        %s344 = sand.u32 %s199, 1
        %s345 = smul.addr %s344, 8
        %s346 = scalar_lea.vmem [#allocation9], %s345
        %p347 = scmp.lt.s32.totalorder %s29, 1
        %s348 = scalar_select %p347, %s29, 1
        %s349 = smul.addr %s348, 8
        %s350 = scalar_lea.vmem %s5, %s349
        %v351 = vld [vmem:[%s299] sm:$0xff]
        %v352 = vld [vmem:[#allocation5] sm:$0xff]
        %v353 = vld [vmem:[#allocation5 + $0x8] sm:$0xff]
        %v354 = vld [vmem:[#allocation5 + $0x10] sm:$0xff]
        %v355 = vld [vmem:[#allocation5 + $0x18] sm:$0xff]
        %v356 = vld [vmem:[%s2] sm:$0x1]
        %v358 = vlaneseq
        %v359 = vshrl.u32 %v358, 7
        %v360 = vsub.s32 0, %v359
        %v361 = vrot.slane %v356, %v360
        %vm363 = vcmask 261120
        %v365 = vsel %vm363, %v351, 0
        %367 = vmatprep.subr.mxu0 0.0
        %368 = vmatpush1.msra.mxu0 %v352
        %369 = vmatprep.subr.mxu0 0.0
        %370 = vmatpush1.msra.mxu0 %v353
        %371 = vmatprep.subr.mxu0 0.0
        %372 = vmatpush1.msra.mxu0 %v354
        %373 = vmatprep.subr.mxu0 0.0
        %374 = vmatpush1.msra.mxu0 %v355
        %375 = vmatprep.subr.mxu0 0.0
        %376 = vmatpush1.msra.mxu0 0.0
        %377 = vmatprep.subr.mxu0 0.0
        %378 = vmatpush1.msra.mxu0 0.0
        %379 = vmatprep.subr.mxu0 0.0
        %380 = vmatpush1.msra.mxu0 0.0
        %381 = vmatprep.subr.mxu0 0.0
        %382 = vmatpush1.msra.mxu0 0.0
        %383 = vmatprep.subr.mxu0 0.0
        %384 = vmatpush1.msra.mxu0 0.0
        %385 = vmatprep.subr.mxu0 0.0
        %386 = vmatpush1.msra.mxu0 0.0
        %387 = vmatprep.subr.mxu0 0.0
        %388 = vmatpush1.msra.mxu0 0.0
        %389 = vmatprep.subr.mxu0 0.0
        %390 = vmatpush1.msra.mxu0 0.0
        %391 = vmatprep.subr.mxu0 0.0
        %392 = vmatpush1.msra.mxu0 0.0
        %393 = vmatprep.subr.mxu0 0.0
        %394 = vmatpush1.msra.mxu0 0.0
        %395 = vmatprep.subr.mxu0 0.0
        %396 = vmatpush1.msra.mxu0 0.0
        %397 = vmatprep.subr.mxu0 0.0
        %398 = vmatpush1.msra.mxu0 0.0
        %399 = vmatprep.subr.mxu0 0.0
        %400 = vmatpush1.msra.mxu0 0.0
        %401 = vmatprep.subr.mxu0 0.0
        %402 = vmatpush1.msra.mxu0 0.0
        %403 = vmatprep.subr.mxu0 0.0
        %404 = vmatpush1.msra.mxu0 0.0
        %405 = vmatprep.subr.mxu0 0.0
        %406 = vmatpush1.msra.mxu0 0.0
        %407 = vmatprep.subr.mxu0 0.0
        %408 = vmatpush1.msra.mxu0 0.0
        %409 = vmatprep.subr.mxu0 0.0
        %410 = vmatpush1.msra.mxu0 0.0
        %411 = vmatprep.subr.mxu0 0.0
        %412 = vmatpush1.msra.mxu0 0.0
        %413 = vmatprep.subr.mxu0 0.0
        %414 = vmatpush1.msra.mxu0 0.0
        %415 = vmatprep.subr.mxu0 0.0
        %416 = vmatpush1.msra.mxu0 0.0
        %417 = vmatprep.subr.mxu0 0.0
        %418 = vmatpush1.msra.mxu0 0.0
        %419 = vmatprep.subr.mxu0 0.0
        %420 = vmatpush1.msra.mxu0 0.0
        %421 = vmatprep.subr.mxu0 0.0
        %422 = vmatpush1.msra.mxu0 0.0
        %423 = vmatprep.subr.mxu0 0.0
        %424 = vmatpush1.msra.mxu0 0.0
        %425 = vmatprep.subr.mxu0 0.0
        %426 = vmatpush1.msra.mxu0 0.0
        %427 = vmatprep.subr.mxu0 0.0
        %428 = vmatpush1.msra.mxu0 0.0
        %429 = vmatprep.subr.mxu0 0.0
        %430 = vmatpush1.msra.mxu0 0.0
        %431 = vmatprep.mubr.f32.mxu0 0.0
        %432 = vmatmul.mubr.f32.gmra.mrb[0].mxu0 %v365
        %v433 = vpop.f32.mrb[0].mxu0
        %v434 = vadd.f32 %v361, %v433
        %v435 = vpop.f32.mrb[0].mxu0
        %436 = vdwg.mxu0
        %v437 = vlaneseq
        %v438 = vand.u32 %v437, 127
        %vm439 = vcmp.ge.s32.totalorder %v438, 16
        %v440 = vmax.f32 %v434, -10.0
        %v441 = vmin.f32 %v440, 2.0
        %v442 = vsel %vm439, %v441, %v434
        %443 = vst.msk [vmem:[%s339] sm:$0xff] %vm363, %v442
        %v444 = vmul.f32 %v442, 0.5
        %v445 = vmul.f32 %v444, 1.442695
        %v446 = vpow.pop %v445
        %v447 = vld [vmem:[%s350] sm:$0xff]
        %449 = vrot.lane.b32.xlu0 %v447, 16
        %v450 = vpop.permute.xlu0 %449
        %v452 = vmul.f32 %v446, %v450
        %454 = vrot.lane.b32.xlu0 %v452, 112
        %v455 = vpop.permute.xlu0 %454
        %v457 = vadd.f32 %v442, %v455
        %v458 = vld [vmem:[#allocation7] sm:$0xff]
        %v459 = vld [vmem:[#allocation7 + $0x8] sm:$0xff]
        %v460 = vld [vmem:[%s4] sm:$0x1]
        %v462 = vlaneseq
        %v463 = vshrl.u32 %v462, 7
        %v464 = vsub.s32 0, %v463
        %v465 = vrot.slane %v460, %v464
        %vm467 = vcmask 130048
        %v469 = vsel %vm467, %v457, 0
        %471 = vmatprep.subr.mxu0 0.0
        %472 = vmatpush1.msra.mxu0 %v458
        %473 = vmatprep.subr.mxu0 0.0
        %474 = vmatpush1.msra.mxu0 %v459
        %475 = vmatprep.subr.mxu0 0.0
        %476 = vmatpush1.msra.mxu0 0.0
        %477 = vmatprep.subr.mxu0 0.0
        %478 = vmatpush1.msra.mxu0 0.0
        %479 = vmatprep.subr.mxu0 0.0
        %480 = vmatpush1.msra.mxu0 0.0
        %481 = vmatprep.subr.mxu0 0.0
        %482 = vmatpush1.msra.mxu0 0.0
        %483 = vmatprep.subr.mxu0 0.0
        %484 = vmatpush1.msra.mxu0 0.0
        %485 = vmatprep.subr.mxu0 0.0
        %486 = vmatpush1.msra.mxu0 0.0
        %487 = vmatprep.subr.mxu0 0.0
        %488 = vmatpush1.msra.mxu0 0.0
        %489 = vmatprep.subr.mxu0 0.0
        %490 = vmatpush1.msra.mxu0 0.0
        %491 = vmatprep.subr.mxu0 0.0
        %492 = vmatpush1.msra.mxu0 0.0
        %493 = vmatprep.subr.mxu0 0.0
        %494 = vmatpush1.msra.mxu0 0.0
        %495 = vmatprep.subr.mxu0 0.0
        %496 = vmatpush1.msra.mxu0 0.0
        %497 = vmatprep.subr.mxu0 0.0
        %498 = vmatpush1.msra.mxu0 0.0
        %499 = vmatprep.subr.mxu0 0.0
        %500 = vmatpush1.msra.mxu0 0.0
        %501 = vmatprep.subr.mxu0 0.0
        %502 = vmatpush1.msra.mxu0 0.0
        %503 = vmatprep.subr.mxu0 0.0
        %504 = vmatpush1.msra.mxu0 0.0
        %505 = vmatprep.subr.mxu0 0.0
        %506 = vmatpush1.msra.mxu0 0.0
        %507 = vmatprep.subr.mxu0 0.0
        %508 = vmatpush1.msra.mxu0 0.0
        %509 = vmatprep.subr.mxu0 0.0
        %510 = vmatpush1.msra.mxu0 0.0
        %511 = vmatprep.subr.mxu0 0.0
        %512 = vmatpush1.msra.mxu0 0.0
        %513 = vmatprep.subr.mxu0 0.0
        %514 = vmatpush1.msra.mxu0 0.0
        %515 = vmatprep.subr.mxu0 0.0
        %516 = vmatpush1.msra.mxu0 0.0
        %517 = vmatprep.subr.mxu0 0.0
        %518 = vmatpush1.msra.mxu0 0.0
        %519 = vmatprep.subr.mxu0 0.0
        %520 = vmatpush1.msra.mxu0 0.0
        %521 = vmatprep.subr.mxu0 0.0
        %522 = vmatpush1.msra.mxu0 0.0
        %523 = vmatprep.subr.mxu0 0.0
        %524 = vmatpush1.msra.mxu0 0.0
        %525 = vmatprep.subr.mxu0 0.0
        %526 = vmatpush1.msra.mxu0 0.0
        %527 = vmatprep.subr.mxu0 0.0
        %528 = vmatpush1.msra.mxu0 0.0
        %529 = vmatprep.subr.mxu0 0.0
        %530 = vmatpush1.msra.mxu0 0.0
        %531 = vmatprep.subr.mxu0 0.0
        %532 = vmatpush1.msra.mxu0 0.0
        %533 = vmatprep.subr.mxu0 0.0
        %534 = vmatpush1.msra.mxu0 0.0
        %535 = vmatprep.mubr.f32.mxu0 0.0
        %536 = vmatmul.mubr.f32.gmra.mrb[0].mxu0 %v469
        %v537 = vpop.f32.mrb[0].mxu0
        %v538 = vadd.f32 %v465, %v537
        %v539 = vpop.f32.mrb[0].mxu0
        %540 = vdwg.mxu0
        %v541 = vxor.u32 %v538, 2147483648
        %v542 = vmul.f32 %v541, 1.442695
        %v543 = vpow.pop %v542
        %v544 = vadd.f32 %v543, 1.0
        %v545 = vrcp.pop %v544
        %v546 = vmul.f32 1.0, %v545
        %547 = vst.msk [vmem:[%s346] sm:$0xff] %vm363, %v546
        %s548 = sand.u32 %s173, 1
        %s549 = scalar_lea.sflag [#allocation4], %s548
        %s550 = sand.u32 %s173, 1
        %s551 = smul.addr %s550, 8
        %s552 = scalar_lea.vmem [#allocation8], %s551
        %s553 = sand.u32 %s199, 1
        %s554 = scalar_lea.sflag [#allocation10], %s553
        %s555 = sand.u32 %s199, 1
        %s556 = smul.addr %s555, 8
        %s557 = scalar_lea.vmem [#allocation9], %s556
        // Predicated region
        $region57: #{tpu_custom_call.1} parent=43 // pred_check
          %p558 = pneg %p183
        $region58: #{tpu_custom_call.1} parent=43 // pred_check_branch
          %560 = sbr.rel (%p558) target = $region60
        $region59: #{tpu_custom_call.1} parent=43 // pred_region
          %s562 = ssub.s32 128, 128
          %563 = vsyncadd %s549, %s562
          %s564 = smul.addr %s29, 128
          %s565 = scalar_lea.hbm %s6, %s564
          %s567 = sshll.u32 %s552, 4
          %s568 = int_to_ptr.vmem [resolvable:$true] %s567
          %570 = dma.vmem_to_hbm [thread:$0]  %s568, 128, %s565, %s549
        $region60: #{tpu_custom_call.1} parent=43 // pred_fallthru
          _
        // Predicated region
        $region61: #{tpu_custom_call.1} parent=43 // pred_check
          %p571 = pneg %p209
        $region62: #{tpu_custom_call.1} parent=43 // pred_check_branch
          %573 = sbr.rel (%p571) target = $region64
        $region63: #{tpu_custom_call.1} parent=43 // pred_region
          %s575 = ssub.s32 128, 128
          %576 = vsyncadd %s554, %s575
          %s577 = smul.addr %s29, 128
          %s578 = scalar_lea.hbm %s7, %s577
          %s580 = sshll.u32 %s557, 4
          %s581 = int_to_ptr.vmem [resolvable:$true] %s580
          %583 = dma.vmem_to_hbm [thread:$0]  %s581, 128, %s578, %s554
        $region64: #{tpu_custom_call.1} parent=43 // pred_fallthru
          _
      $region44: #{tpu_custom_call.1} parent=5 // pred_fallthru
        _
      %p584 = scmp.le.s32.totalorder 2, %s24
      // Predicated region
      $region65: #{tpu_custom_call.1} parent=5 // pred_check
        %p585 = pneg %p584
      $region66: #{tpu_custom_call.1} parent=5 // pred_check_branch
        %587 = sbr.rel (%p585) target = $region68
      $region67: #{tpu_custom_call.1} parent=5 // pred_region
        %s588 = ssub.s32 %s24, 2
        // Predicated region
        $region69: #{tpu_custom_call.1} parent=67 // pred_check
          %p589 = pneg %p189
        $region70: #{tpu_custom_call.1} parent=67 // pred_check_branch
          %591 = sbr.rel (%p589) target = $region72
        $region71: #{tpu_custom_call.1} parent=67 // pred_region
          %s592 = sand.u32 %s174, 1
          %s593 = scalar_lea.sflag [#allocation4], %s592
          %s594 = sand.u32 %s174, 1
          %s595 = smul.addr %s594, 8
          %s596 = scalar_lea.vmem [#allocation8], %s595
          %597 = dma.done %s593, 128
        $region72: #{tpu_custom_call.1} parent=67 // pred_fallthru
          _
        // Predicated region
        $region73: #{tpu_custom_call.1} parent=67 // pred_check
          %p598 = pneg %p215
        $region74: #{tpu_custom_call.1} parent=67 // pred_check_branch
          %600 = sbr.rel (%p598) target = $region76
        $region75: #{tpu_custom_call.1} parent=67 // pred_region
          %s601 = sand.u32 %s200, 1
          %s602 = scalar_lea.sflag [#allocation10], %s601
          %s603 = sand.u32 %s200, 1
          %s604 = smul.addr %s603, 8
          %s605 = scalar_lea.vmem [#allocation9], %s604
          %606 = dma.done %s602, 128
        $region76: #{tpu_custom_call.1} parent=67 // pred_fallthru
          _
      $region68: #{tpu_custom_call.1} parent=5 // pred_fallthru
        _
    $region6: #{tpu_custom_call.1} parent=1 // loop_footer
      %s28 = sadd.s32 1, %s24
    $region7: #{tpu_custom_call.1} parent=1 // loop_footer_branch
      %23 = sbr.rel target = $region3
    $region8: #{tpu_custom_call.1} parent=1 // loop_exit
      _
    %607 = vsyncpa [#allocation3], 1
    %s608 = scalar_lea.sflag [#allocation3], 1
    %609 = vsyncpa %s608, 1
    %610 = vsyncpa [#allocation6], 1
    %611 = vsyncpa [#allocation4], 1
    %s612 = scalar_lea.sflag [#allocation4], 1
    %613 = vsyncpa %s612, 1
    %614 = vsyncpa [#allocation10], 1
    %s615 = scalar_lea.sflag [#allocation10], 1
    %616 = vsyncpa %s615, 1

</llo_original>
